<compile_context>
chip_gen: v7x
topology: tpu7x:2x2x1
jax: 0.10.0
libtpu: 0.0.40
codegen_flags: <defaults>
</compile_context>

<pallas_src>
import functools

import jax
import jax.numpy as jnp
from jax.experimental import pallas as pl
from jax.experimental.pallas import tpu as pltpu

_LANES = 128            # lane (fast) axis width
_SUBLANES = 8           # sublane axis of one f32 vreg
_MAX_BLOCK_ROWS = 4096  # rows per grid step: 2 MiB per f32 input block
_NUM_SPLITS = 2         # leading "parallel" grid axis (2 TensorCores on v7x)


def _round_up(x, m):
    return ((x + m - 1) // m) * m


def _fnr_kernel(pred_ref, tgt_ref, o_ref, *,
                rows, block_rows, blocks_per_split, full_blocks, needs_mask):
    """One grid step: fold this block's FN / positive indicators into the per-split
    vreg-shaped output accumulators (o_ref block is resident across the i axis)."""
    c = pl.program_id(0)                 # split (TensorCore) index   -- "parallel"
    i = pl.program_id(1)                 # block index within split   -- "arbitrary"
    b = c * blocks_per_split + i         # global, unclamped block index

    @pl.when(i == 0)
    def _():
        o_ref[...] = jnp.zeros_like(o_ref)

    def accumulate(mask_rows):
        p = pred_ref[...]                # native dtype (f32 / bf16) probabilities
        t = tgt_ref[...]                 # native dtype (int32 / int8 / bool) labels
        tgt_pos = t != 0
        # pred negative == (p < 0.5)  <=>  not (p >= 0.5); ties at exactly 0.5 count
        # as predicted-positive, matching the `preds >= threshold` binarization.
        fn = jnp.logical_and(tgt_pos, p < 0.5)
        if mask_rows:
            # Only traced for the partial / duplicated blocks; never runs on the hot path.
            row_ids = jax.lax.broadcasted_iota(jnp.int32, (block_rows, _LANES), 0)
            valid = (b * block_rows + row_ids) < rows
            fn = jnp.logical_and(fn, valid)
            tgt_pos = jnp.logical_and(tgt_pos, valid)
        # Fold (block_rows, 128) -> (8, 128): tile-aligned reshape + VALU adds only.
        fn_part = jnp.sum(fn.reshape(-1, _SUBLANES, _LANES).astype(jnp.int32), axis=0)
        pos_part = jnp.sum(tgt_pos.reshape(-1, _SUBLANES, _LANES).astype(jnp.int32), axis=0)
        o_ref[0, 0] += fn_part
        o_ref[0, 1] += pos_part

    if needs_mask:
        @pl.when(b < full_blocks)        # fully-valid blocks: unmasked hot path
        def _():
            accumulate(False)

        @pl.when(b >= full_blocks)       # final partial block / clamped duplicate blocks
        def _():
            accumulate(True)
    else:
        accumulate(False)


def false_negative_rate(inputs, targets):
    """inputs: float probabilities (any shape); targets: {0,1} labels (same shape).

    Dtypes are consumed as-is (no wrapper casts).  The kernel is HBM-bound, so prefer
    int8 / bool targets over int32 at the call site (5 B/elem instead of 8 B/elem).
    Inputs are assumed to be probabilities in [0, 1]; raw logits are NOT sigmoided."""
    pred_flat = inputs.reshape(-1)       # free reshape, no copy
    tgt_flat = targets.reshape(-1)
    n = pred_flat.shape[0]

    if n % _LANES != 0:
        # TODO(synk): rare ragged-lane path pays a one-time pad copy; zero pads
        # contribute to neither FN nor P so the result is unchanged.
        pad = _LANES - n % _LANES
        pred_flat = jnp.pad(pred_flat, (0, pad))
        tgt_flat = jnp.pad(tgt_flat, (0, pad))

    rows = pred_flat.shape[0] // _LANES
    pred2d = pred_flat.reshape(rows, _LANES)   # free reshape (row-major)
    tgt2d = tgt_flat.reshape(rows, _LANES)

    # Block row count: full array if it fits (and is vreg-aligned), else 4096-row tiles.
    # Rounded to 32 when padding is needed so sub-32-bit target dtypes stay tile-legal.
    if rows <= _MAX_BLOCK_ROWS:
        block_rows = rows if rows % _SUBLANES == 0 else _round_up(rows, 32)
    else:
        block_rows = _MAX_BLOCK_ROWS

    nblocks = pl.cdiv(rows, block_rows)
    num_splits = _NUM_SPLITS if nblocks >= _NUM_SPLITS else 1
    blocks_per_split = pl.cdiv(nblocks, num_splits)
    full_blocks = rows // block_rows                     # blocks entirely in-range
    needs_mask = num_splits * blocks_per_split > full_blocks

    # Clamp the block index only when the rectangular grid over-covers the block range;
    # duplicated blocks read valid data and are fully masked off inside the kernel.
    if num_splits * blocks_per_split == nblocks:
        in_map = lambda c, i: (c * blocks_per_split + i, 0)
    else:
        in_map = lambda c, i: (jnp.minimum(c * blocks_per_split + i, nblocks - 1), 0)

    kernel = functools.partial(
        _fnr_kernel, rows=rows, block_rows=block_rows,
        blocks_per_split=blocks_per_split, full_blocks=full_blocks,
        needs_mask=needs_mask)

    # Per-split partial counts: [split, {fn, pos}, 8, 128] int32.
    partials = pl.pallas_call(
        kernel,
        out_shape=jax.ShapeDtypeStruct((num_splits, 2, _SUBLANES, _LANES), jnp.int32),
        grid_spec=pltpu.PrefetchScalarGridSpec(
            num_scalar_prefetch=0,
            grid=(num_splits, blocks_per_split),
            in_specs=[
                pl.BlockSpec((block_rows, _LANES), in_map),
                pl.BlockSpec((block_rows, _LANES), in_map),
            ],
            out_specs=pl.BlockSpec((1, 2, _SUBLANES, _LANES),
                                   lambda c, i: (c, 0, 0, 0)),
        ),
        compiler_params=pltpu.CompilerParams(
            dimension_semantics=("parallel", "arbitrary")),
    )(pred2d, tgt2d)

    fn_total = jnp.sum(partials[:, 0]).astype(jnp.float32)
    pos_total = jnp.sum(partials[:, 1]).astype(jnp.float32)
    # Row-normalized confusion-matrix entry [1][0]: FN / (#target positives).
    # (Division by zero when there are no positives -> nan, same as the reference.)
    return fn_total / pos_total


def _reference_fnr(inputs, targets):
    pred_pos = inputs >= 0.5
    tgt_pos = targets != 0
    fn = jnp.sum(jnp.logical_and(tgt_pos, jnp.logical_not(pred_pos))).astype(jnp.float32)
    pos = jnp.sum(tgt_pos).astype(jnp.float32)
    return fn / pos


if __name__ == "__main__":
    key = jax.random.PRNGKey(0)

    # --- Test 1: small NCHW segmentation-style metric (primary example) ---------------
    k1, k2, key = jax.random.split(key, 3)
    N, C, H, W = 2, 4, 16, 16
    inputs1 = jax.random.uniform(k1, (N, C, H, W), dtype=jnp.float32)
    targets1 = jax.random.bernoulli(k2, 0.4, (N, C, H, W)).astype(jnp.int32)
    fnr1 = false_negative_rate(inputs1, targets1)
    jax.block_until_ready(fnr1)
    ref1 = _reference_fnr(inputs1, targets1)
    assert jnp.allclose(fnr1, ref1, atol=1e-6), (fnr1, ref1)

    # --- Test 2: element count not divisible by 128 (pad fallback + masked block) -----
    k1, k2, key = jax.random.split(key, 3)
    inputs2 = jax.random.uniform(k1, (3, 5, 41, 53), dtype=jnp.float32)
    targets2 = jax.random.bernoulli(k2, 0.3, (3, 5, 41, 53)).astype(jnp.int32)
    fnr2 = false_negative_rate(inputs2, targets2)
    jax.block_until_ready(fnr2)
    ref2 = _reference_fnr(inputs2, targets2)
    assert jnp.allclose(fnr2, ref2, atol=1e-6), (fnr2, ref2)

    # --- Test 3: multi-block, 2-way split, ragged last block, int8 targets ------------
    k1, k2, key = jax.random.split(key, 3)
    inputs3 = jax.random.uniform(k1, (2, 1, 2000, 320), dtype=jnp.float32)
    targets3 = jax.random.bernoulli(k2, 0.5, (2, 1, 2000, 320)).astype(jnp.int8)
    fnr3 = false_negative_rate(inputs3, targets3)
    jax.block_until_ready(fnr3)
    ref3 = _reference_fnr(inputs3, targets3)
    assert jnp.allclose(fnr3, ref3, atol=1e-6), (fnr3, ref3)

    print("KERNEL_OK")
</pallas_src>

<mosaic_0001>
module attributes {stable_mosaic.version = 11 : i64} {
  func.func @_fnr_kernel(%arg0: i32, %arg1: i32, %arg2: memref<16x128xf32, #tpu.memory_space<vmem>>, %arg3: memref<16x128xi32, #tpu.memory_space<vmem>>, %arg4: memref<1x2x8x128xi32, #tpu.memory_space<vmem>>) attributes {dimension_semantics = [#tpu.dimension_semantics<parallel>, #tpu.dimension_semantics<arbitrary>], iteration_bounds = array<i64: 1, 1>, scalar_prefetch = 0 : i64, scratch_operands = 0 : i64, tpu.core_type = #tpu.core_type<tc>, window_params = [{transform_indices = @transform_0, window_bounds = array<i64: 16, 128>}, {transform_indices = @transform_1, window_bounds = array<i64: 16, 128>}, {transform_indices = @transform_2, window_bounds = array<i64: 1, 2, 8, 128>}]} {
    %c0_i32 = arith.constant 0 : i32
    %0 = arith.cmpi eq, %arg1, %c0_i32 : i32
    %1 = arith.extui %0 : i1 to i32
    %c0_i32_0 = arith.constant 0 : i32
    %2 = arith.cmpi ne, %1, %c0_i32_0 : i32
    scf.if %2 {
      %c0_i32_22 = arith.constant 0 : i32
      %28 = vector.broadcast %c0_i32_22 : i32 to vector<1x2x8x128xi32>
      %c0_23 = arith.constant 0 : index
      %c0_24 = arith.constant 0 : index
      %c0_25 = arith.constant 0 : index
      %c0_26 = arith.constant 0 : index
      %29 = vector.load %arg4[%c0_23, %c0_24, %c0_25, %c0_26] : memref<1x2x8x128xi32, #tpu.memory_space<vmem>>, vector<1x2x8x128xi32>
      tpu.vector_store %arg4[%c0_23, %c0_24, %c0_25, %c0_26], %28 {strides = array<i32>} : memref<1x2x8x128xi32, #tpu.memory_space<vmem>>, vector<1x2x8x128xi32>,
    } else {
    }
    %c0 = arith.constant 0 : index
    %c0_1 = arith.constant 0 : index
    %3 = vector.load %arg2[%c0, %c0_1] : memref<16x128xf32, #tpu.memory_space<vmem>>, vector<16x128xf32>
    %c0_2 = arith.constant 0 : index
    %c0_3 = arith.constant 0 : index
    %4 = vector.load %arg3[%c0_2, %c0_3] : memref<16x128xi32, #tpu.memory_space<vmem>>, vector<16x128xi32>
    %c0_i32_4 = arith.constant 0 : i32
    %5 = vector.broadcast %c0_i32_4 : i32 to vector<16x128xi32>
    %6 = arith.cmpi ne, %4, %5 : vector<16x128xi32>
    %cst = arith.constant 5.000000e-01 : f32
    %7 = vector.broadcast %cst : f32 to vector<16x128xf32>
    %8 = arith.cmpf olt, %3, %7 : vector<16x128xf32>
    %9 = arith.andi %6, %8 : vector<16x128xi1>
    %10 = vector.shape_cast %9 : vector<16x128xi1> to vector<2x8x128xi1>
    %11 = arith.extui %10 : vector<2x8x128xi1> to vector<2x8x128xi32>
    %cst_5 = arith.constant dense<0> : vector<8x128xi32>
    %12 = vector.multi_reduction <add>, %11, %cst_5 [0] : vector<2x8x128xi32> to vector<8x128xi32>
    %13 = vector.shape_cast %6 : vector<16x128xi1> to vector<2x8x128xi1>
    %14 = arith.extui %13 : vector<2x8x128xi1> to vector<2x8x128xi32>
    %cst_6 = arith.constant dense<0> : vector<8x128xi32>
    %15 = vector.multi_reduction <add>, %14, %cst_6 [0] : vector<2x8x128xi32> to vector<8x128xi32>
    %c0_7 = arith.constant 0 : index
    %c0_8 = arith.constant 0 : index
    %c0_9 = arith.constant 0 : index
    %c0_10 = arith.constant 0 : index
    %16 = vector.load %arg4[%c0_7, %c0_8, %c0_9, %c0_10] : memref<1x2x8x128xi32, #tpu.memory_space<vmem>>, vector<1x1x8x128xi32>
    %17 = vector.shape_cast %16 : vector<1x1x8x128xi32> to vector<8x128xi32>
    %18 = arith.addi %17, %12 : vector<8x128xi32>
    %c0_11 = arith.constant 0 : index
    %c0_12 = arith.constant 0 : index
    %c0_13 = arith.constant 0 : index
    %c0_14 = arith.constant 0 : index
    %19 = vector.load %arg4[%c0_11, %c0_12, %c0_13, %c0_14] : memref<1x2x8x128xi32, #tpu.memory_space<vmem>>, vector<1x1x8x128xi32>
    %20 = vector.shape_cast %19 : vector<1x1x8x128xi32> to vector<8x128xi32>
    %21 = vector.shape_cast %18 : vector<8x128xi32> to vector<1x1x8x128xi32>
    tpu.vector_store %arg4[%c0_11, %c0_12, %c0_13, %c0_14], %21 {strides = array<i32>} : memref<1x2x8x128xi32, #tpu.memory_space<vmem>>, vector<1x1x8x128xi32>,
    %c0_15 = arith.constant 0 : index
    %c1 = arith.constant 1 : index
    %c0_16 = arith.constant 0 : index
    %c0_17 = arith.constant 0 : index
    %22 = vector.load %arg4[%c0_15, %c1, %c0_16, %c0_17] : memref<1x2x8x128xi32, #tpu.memory_space<vmem>>, vector<1x1x8x128xi32>
    %23 = vector.shape_cast %22 : vector<1x1x8x128xi32> to vector<8x128xi32>
    %24 = arith.addi %23, %15 : vector<8x128xi32>
    %c0_18 = arith.constant 0 : index
    %c1_19 = arith.constant 1 : index
    %c0_20 = arith.constant 0 : index
    %c0_21 = arith.constant 0 : index
    %25 = vector.load %arg4[%c0_18, %c1_19, %c0_20, %c0_21] : memref<1x2x8x128xi32, #tpu.memory_space<vmem>>, vector<1x1x8x128xi32>
    %26 = vector.shape_cast %25 : vector<1x1x8x128xi32> to vector<8x128xi32>
    %27 = vector.shape_cast %24 : vector<8x128xi32> to vector<1x1x8x128xi32>
    tpu.vector_store %arg4[%c0_18, %c1_19, %c0_20, %c0_21], %27 {strides = array<i32>} : memref<1x2x8x128xi32, #tpu.memory_space<vmem>>, vector<1x1x8x128xi32>,
    return
  }
  func.func @transform_0(%arg0: i32, %arg1: i32) -> (i32, i32) {
    %c1_i32 = arith.constant 1 : i32
    %0 = arith.muli %arg0, %c1_i32 : i32
    %1 = arith.addi %0, %arg1 : i32
    %c0_i32 = arith.constant 0 : i32
    %c0_i32_0 = arith.constant 0 : i32
    return %1, %c0_i32 : i32, i32
  }
  func.func @transform_1(%arg0: i32, %arg1: i32) -> (i32, i32) {
    %c1_i32 = arith.constant 1 : i32
    %0 = arith.muli %arg0, %c1_i32 : i32
    %1 = arith.addi %0, %arg1 : i32
    %c0_i32 = arith.constant 0 : i32
    %c0_i32_0 = arith.constant 0 : i32
    return %1, %c0_i32 : i32, i32
  }
  func.func @transform_2(%arg0: i32, %arg1: i32) -> (i32, i32, i32, i32) {
    %c0_i32 = arith.constant 0 : i32
    %c0_i32_0 = arith.constant 0 : i32
    %c0_i32_1 = arith.constant 0 : i32
    %c0_i32_2 = arith.constant 0 : i32
    return %arg0, %c0_i32, %c0_i32_0, %c0_i32_1 : i32, i32, i32, i32
  }
}

</mosaic_0001>

<llo_original>
// kernel: tpu_custom_call.1
$region0: #{tpu_custom_call.1}
  #allocation0 [shape = 'u32[]', space=smem, size = 0x4, offset = 0x4, fixed_abs, tag = 'smem constant byte address 0x4 - core index']
  #allocation1 [shape = 'u32[144,128]{1,0:T(1,128)}', space=vmem, size = 0x12000, scoped, tag = 'internal scratch']
  %s0 = inlined_call_operand.hbm [shape: f32[16,128], index: 0, kind: input, shape index: {}]
  %s1 = inlined_call_operand.hbm [shape: s32[16,128], index: 1, kind: input, shape index: {}]
  %s2 = inlined_call_operand.hbm [shape: s32[1,2,8,128], index: 2, kind: output, shape index: {}]
  %s3 = sld [smem:[#allocation0]]
  $region30: #{tpu_custom_call.1} parent=0
    _
  %s5 = ssub.s32 1, %s3
  %s6 = scalar_select 0, %s5, %s3
  $region1: #{tpu_custom_call.1} parent=0
    #allocation2 [shape = 'u8[8192]{0}', space=vmem, size = 0x2000, scoped, tag = 'input window, operand 0, single buffered']
    #allocation3 [shape = 's32[1]{0}', space=sflag, size = 0x4, scoped, tag = 'scoped memory for tpu_custom_call.1']
    #allocation4 [shape = 's32[1]{0}', space=sflag, size = 0x4, scoped, tag = 'scoped memory for tpu_custom_call.1']
    #allocation5 [shape = 'u8[8192]{0}', space=vmem, size = 0x2000, scoped, tag = 'input window, operand 1, single buffered']
    #allocation6 [shape = 's32[1]{0}', space=sflag, size = 0x4, scoped, tag = 'scoped memory for tpu_custom_call.1']
    #allocation7 [shape = 'u8[8192]{0}', space=vmem, size = 0x2000, scoped, tag = 'output window, operand 0, single buffered']
    %7 = vsyncpa [#allocation3], 0
    %8 = vsyncpa [#allocation6], 0
    %9 = vsyncpa [#allocation4], 0
    // Predicated region
    $region2: #{tpu_custom_call.1} parent=1 // pred_check
      _
    $region3: #{tpu_custom_call.1} parent=1 // pred_check_branch
      %11 = sbr.rel (0) target = $region5
    $region4: #{tpu_custom_call.1} parent=1 // pred_region
      %s12 = sadd.s32 0, 0
      %s13 = smul.u32 2, %s12
      %s15 = ssub.s32 256, 256
      %16 = vsyncadd [#allocation3], %s15
      %s17 = smul.addr %s13, 128
      %s18 = scalar_lea.hbm %s0, %s17
      %s19 = sshll.u32 [#allocation2], 4
      %s20 = int_to_ptr.vmem [resolvable:$true] %s19
      %25 = dma.hbm_to_vmem [thread:$0]  %s18, 256, %s20, [#allocation3], 128, 128, 8
    $region5: #{tpu_custom_call.1} parent=1 // pred_fallthru
      _
    // Predicated region
    $region6: #{tpu_custom_call.1} parent=1 // pred_check
      _
    $region7: #{tpu_custom_call.1} parent=1 // pred_check_branch
      %27 = sbr.rel (0) target = $region9
    $region8: #{tpu_custom_call.1} parent=1 // pred_region
      %s28 = sadd.s32 0, 0
      %s29 = smul.u32 2, %s28
      %s31 = ssub.s32 256, 256
      %32 = vsyncadd [#allocation6], %s31
      %s33 = smul.addr %s29, 128
      %s34 = scalar_lea.hbm %s1, %s33
      %s35 = sshll.u32 [#allocation5], 4
      %s36 = int_to_ptr.vmem [resolvable:$true] %s35
      %41 = dma.hbm_to_vmem [thread:$0]  %s34, 256, %s36, [#allocation6], 128, 128, 8
    $region9: #{tpu_custom_call.1} parent=1 // pred_fallthru
      _
    // Predicated region
    $region10: #{tpu_custom_call.1} parent=1 // pred_check
      _
    $region11: #{tpu_custom_call.1} parent=1 // pred_check_branch
      %43 = sbr.rel (0) target = $region13
    $region12: #{tpu_custom_call.1} parent=1 // pred_region
      %44 = dma.done [#allocation3], 256
    $region13: #{tpu_custom_call.1} parent=1 // pred_fallthru
      _
    // Predicated region
    $region14: #{tpu_custom_call.1} parent=1 // pred_check
      _
    $region15: #{tpu_custom_call.1} parent=1 // pred_check_branch
      %46 = sbr.rel (0) target = $region17
    $region16: #{tpu_custom_call.1} parent=1 // pred_region
      %47 = dma.done [#allocation6], 256
    $region17: #{tpu_custom_call.1} parent=1 // pred_fallthru
      _
    %s48 = sadd.s32 0, 0
    %s49 = smul.u32 2, %s48
    %s50 = sadd.s32 0, 0
    %s51 = smul.u32 2, %s50
    %p52 = scmp.eq.s32.totalorder 0, 0
    // Predicated region
    $region18: #{tpu_custom_call.1} parent=1 // pred_check
      %p53 = pneg %p52
    $region19: #{tpu_custom_call.1} parent=1 // pred_check_branch
      %55 = sbr.rel (%p53) target = $region21
    $region20: #{tpu_custom_call.1} parent=1 // pred_region
      %56 = vst [vmem:[#allocation7] sm:$0xff] 0
      %57 = vst [vmem:[#allocation7 + $0x8] sm:$0xff] 0
    $region21: #{tpu_custom_call.1} parent=1 // pred_fallthru
      _
    %v58 = vld [vmem:[#allocation2] sm:$0xff]
    %v59 = vld [vmem:[#allocation2 + $0x8] sm:$0xff]
    %v60 = vld [vmem:[#allocation5] sm:$0xff]
    %v61 = vld [vmem:[#allocation5 + $0x8] sm:$0xff]
    %vm62 = vcmp.ne.s32.totalorder %v60, 0
    %vm63 = vcmp.ne.s32.totalorder %v61, 0
    %vm64 = vcmp.lt.f32.partialorder %v58, 0.5
    %vm65 = vcmp.lt.f32.partialorder %v59, 0.5
    %vm66 = vmand %vm62, %vm64
    %vm67 = vmand %vm63, %vm65
    %v68 = vsel %vm66, 1, 0
    %v69 = vsel %vm67, 1, 0
    %v70 = vadd.s32 %v68, %v69
    %v71 = vsel %vm62, 1, 0
    %v72 = vsel %vm63, 1, 0
    %v73 = vadd.s32 %v71, %v72
    %v74 = vld [vmem:[#allocation7] sm:$0xff]
    %v75 = vadd.s32 %v74, %v70
    %76 = vst [vmem:[#allocation7] sm:$0xff] %v75
    %s77 = scalar_lea.vmem [#allocation7], 8
    %v78 = vld [vmem:[%s77] sm:$0xff]
    %v79 = vadd.s32 %v78, %v73
    %80 = vst [vmem:[%s77] sm:$0xff] %v79
    // Predicated region
    $region22: #{tpu_custom_call.1} parent=1 // pred_check
      _
    $region23: #{tpu_custom_call.1} parent=1 // pred_check_branch
      %82 = sbr.rel (0) target = $region25
    $region24: #{tpu_custom_call.1} parent=1 // pred_region
      %s84 = ssub.s32 256, 256
      %85 = vsyncadd [#allocation4], %s84
      %s86 = sshll.u32 [#allocation7], 4
      %s87 = int_to_ptr.vmem [resolvable:$true] %s86
      %92 = dma.vmem_to_hbm [thread:$0]  %s87, 256, %s2, [#allocation4], 128, 128, 8
    $region25: #{tpu_custom_call.1} parent=1 // pred_fallthru
      _
    // Predicated region
    $region26: #{tpu_custom_call.1} parent=1 // pred_check
      _
    $region27: #{tpu_custom_call.1} parent=1 // pred_check_branch
      %94 = sbr.rel (0) target = $region29
    $region28: #{tpu_custom_call.1} parent=1 // pred_region
      %95 = dma.done [#allocation4], 256
    $region29: #{tpu_custom_call.1} parent=1 // pred_fallthru
      _
    %96 = vsyncpa [#allocation3], 1
    %97 = vsyncpa [#allocation6], 1
    %98 = vsyncpa [#allocation4], 1

</llo_original>
